<compile_context>
chip_gen: v7x
topology: tpu7x:2x2x1
jax: 0.10.0
libtpu: 0.0.40
codegen_flags: <defaults>
</compile_context>

<pallas_src>
import functools

import jax
import jax.numpy as jnp
from jax import lax
from jax.experimental import pallas as pl
from jax.experimental.pallas import tpu as pltpu


def _conv1d_block_kernel(x_ref, w_ref, b_ref, g_ref, be_ref, m_ref, seg_ref,
                         bc_ref, o_ref, *, kernel_size, approx_recip):
    """Fused Conv1d('same') -> GroupNorm -> Mish for one tile of batch elems.

    x_ref:   (Bt, Cin, L)    input tile (NCL), compute dtype (f32 or bf16)
    w_ref:   (Cout, K*Cin)   conv weight, im2col order (tap-major, then Cin)
    b_ref:   (Cout, 1)       conv bias (f32)
    g_ref:   (Cout, 1)       GroupNorm gamma (f32)
    be_ref:  (Cout, 1)       GroupNorm beta (f32)
    m_ref:   (Cout, Cout)    block-diagonal group-mean operator (1/(cg*L))
    seg_ref: (Bt*L, Bt)      per-batch lane-sum one-hot
    bc_ref:  (Bt, Bt*L)      per-batch lane broadcast (seg transposed)
    o_ref:   (Bt, Cout, L)   output tile (NCL)
    """
    K = kernel_size
    pad = K // 2
    Bt, Cin, L = x_ref.shape
    P = Bt * L

    # Grid-invariant operands: loaded once per grid step.
    w = w_ref[...]
    bias = b_ref[...]
    gamma = g_ref[...]
    beta = be_ref[...]
    gmean = m_ref[...]
    seg = seg_ref[...]
    bcast = bc_ref[...]

    # Pack the Bt batch elements along the lane axis: (Cin, Bt*L) slab.
    slab = jnp.concatenate([x_ref[bt] for bt in range(Bt)], axis=1)

    # Position within each length-L segment (for 'same'-padding edge masks).
    lpos = lax.broadcasted_iota(jnp.int32, (Cin, P), 1) % L

    # ---- Conv1d: fused 'same' padding via lane rotation (XLU) + edge masks,
    # then ONE im2col MXU matmul with a K*Cin-deep contraction. ---------------
    taps = []
    for k in range(K):
        s = k - pad                          # out[:, l] consumes x[:, l + s]
        if s == 0:
            taps.append(slab)
        else:
            xs = pltpu.roll(slab, shift=(-s) % P, axis=1)
            if s > 0:
                xs = jnp.where(lpos < L - s, xs, 0)        # right edge -> 0
            else:
                xs = jnp.where(lpos >= -s, xs, 0)          # left edge -> 0
            taps.append(xs)
    xk = jnp.concatenate(taps, axis=0)                      # (K*Cin, P)
    acc = jnp.dot(w, xk, preferred_element_type=jnp.float32) + bias  # (Cout, P)

    # ---- GroupNorm per batch element (two-pass centered variance, biased,
    # eps=1e-5): segment-sum over lanes, group-average, broadcast back. -------
    s1 = jnp.dot(acc, seg, preferred_element_type=jnp.float32)         # (Cout, Bt)
    mu_cb = jnp.dot(gmean, s1, preferred_element_type=jnp.float32)     # (Cout, Bt)
    mu = jnp.dot(mu_cb, bcast, preferred_element_type=jnp.float32)     # (Cout, P)
    cen = acc - mu
    s2 = jnp.dot(cen * cen, seg, preferred_element_type=jnp.float32)   # (Cout, Bt)
    var_cb = jnp.dot(gmean, s2, preferred_element_type=jnp.float32)    # (Cout, Bt)
    scale_cb = lax.rsqrt(var_cb + 1e-5) * gamma                        # (Cout, Bt)
    scale = jnp.dot(scale_cb, bcast, preferred_element_type=jnp.float32)  # (Cout, P)
    y = cen * scale + beta                                             # (Cout, P)

    # ---- Mish: one transcendental (exp) + one EUP reciprocal ----------------
    # tanh(softplus(y)) = (t^2 + 2t)/(t^2 + 2t + 2) with t = e^y, rewritten
    # with e = exp(-|y|) so it never overflows.
    e = jnp.exp(-jnp.abs(y))
    nonneg = y >= 0.0
    two_e = e + e
    esq = e * e
    n = jnp.where(nonneg, 1.0 + two_e, esq + two_e)
    d = n + jnp.where(nonneg, esq + esq, 2.0)
    out = ((y * n) * pl.reciprocal(d, approx=approx_recip)).astype(o_ref.dtype)

    # Unpack the lane-packed slab back into the NCL output block.
    for bt in range(Bt):
        o_ref[bt] = out[:, bt * L:(bt + 1) * L]


def _tpu_vmem_capacity_bytes():
    """VMEM capacity per TensorCore; conservative (v7x-like) fallback."""
    try:
        cap = getattr(pltpu.get_tpu_info(), "vmem_capacity_bytes", None)
        if cap:
            return int(cap)
    except Exception:
        pass
    return 64 << 20


def _pick_batch_tile(B, L, est_fn, *, budget, want_even_steps):
    """Largest divisor of B whose estimated VMEM fits `budget`, preferring an
    even grid-step count on 2-TC chips and Bt*L aligned to 256/128 lanes."""
    best_bt, best_key = 1, None
    for bt in range(1, B + 1):
        if B % bt or est_fn(bt) > budget:
            continue
        steps = B // bt
        even_ok = 1 if (not want_even_steps or steps % 2 == 0) else 0
        lanes = bt * L
        lane_score = 2 if lanes % 256 == 0 else (1 if lanes % 128 == 0 else 0)
        key = (even_ok, lane_score, bt)
        if best_key is None or key > best_key:
            best_bt, best_key = bt, key
    return best_bt


def conv1d_block(x_ncl, weight, bias, gamma, beta, *, kernel_size, n_groups,
                 compute_dtype=jnp.float32, out_dtype=None, batch_tile=None,
                 approx_reciprocal=False):
    """x_ncl: (B, Cin, L) PyTorch NCL. weight: (Cout, Cin, K) as nn.Conv1d.

    compute_dtype=bf16 halves HBM/VMEM traffic of x and the conv weight;
    accumulation, GroupNorm statistics and the elementwise tail stay in f32.
    out_dtype (default: input dtype) controls the largest HBM store stream.
    """
    B, Cin, L = x_ncl.shape
    Cout, Cin_w, K = weight.shape
    assert K == kernel_size and Cin_w == Cin
    assert K % 2 == 1, "Conv1dBlock uses padding=K//2 ('same'); odd K assumed"
    assert Cout % n_groups == 0
    G = n_groups
    cg = Cout // G
    if out_dtype is None:
        out_dtype = x_ncl.dtype
    in_b = jnp.dtype(compute_dtype).itemsize
    out_b = jnp.dtype(out_dtype).itemsize

    # Sublane-align Cin to the compute dtype packing (8 for f32, 16 for bf16)
    # so the im2col tap concat is a pure stack and the MXU feed stays aligned.
    sub = max(8, 32 // in_b)
    Cin_p = ((Cin + sub - 1) // sub) * sub
    x = x_ncl.astype(compute_dtype)
    w = weight
    if Cin_p != Cin:
        x = jnp.pad(x, ((0, 0), (0, Cin_p - Cin), (0, 0)))
        w = jnp.pad(w, ((0, 0), (0, Cin_p - Cin), (0, 0)))

    # Parameter re-layouts are tiny one-time ops; activations stay in NCL.
    w2 = jnp.transpose(w, (0, 2, 1)).reshape(Cout, K * Cin_p).astype(compute_dtype)
    b_col = bias.reshape(Cout, 1).astype(jnp.float32)
    g_col = gamma.reshape(Cout, 1).astype(jnp.float32)
    be_col = beta.reshape(Cout, 1).astype(jnp.float32)
    gids = jnp.arange(Cout) // cg
    # Precomputed block-diagonal group-mean operator (folds agg and bc).
    gmean_mat = (gids[:, None] == gids[None, :]).astype(jnp.float32) / float(cg * L)

    # --- generation-aware tiling / VMEM policy --------------------------------
    vmem_cap = _tpu_vmem_capacity_bytes()
    small_vmem = vmem_cap <= (96 << 20)          # v7x-like: 64 MiB per TC, 2 TCs
    if small_vmem:
        budget, limit_cap, want_even = 36 << 20, 48 << 20, True
    else:                                        # v5e / v6e: 128 MiB, 1 TC
        budget, limit_cap, want_even = 84 << 20, 100 << 20, False

    def est_vmem(bt):
        """Honest per-step estimate: double-buffered I/O blocks + (double-
        buffered) grid-invariant operands + in-kernel temporaries."""
        P = bt * L
        io = 2 * bt * (Cin_p * L * in_b + Cout * L * out_b)
        consts = 2 * (Cout * K * Cin_p * in_b + Cout * Cout * 4
                      + 2 * P * bt * 4 + 3 * Cout * 4)
        temps = (K + 1) * Cin_p * P * in_b + 6 * Cout * P * 4
        return io + consts + temps

    if batch_tile is None:
        batch_tile = _pick_batch_tile(B, L, est_vmem, budget=budget,
                                      want_even_steps=want_even)
    Bt = batch_tile
    assert B % Bt == 0
    P = Bt * L

    # Per-batch segment one-hot (lane sums) and its transpose (broadcast back).
    pos_b = jnp.arange(P) // L
    seg = (pos_b[:, None] == jnp.arange(Bt)[None, :]).astype(jnp.float32)  # (P, Bt)
    bcast = jnp.transpose(seg)                                             # (Bt, P)

    need = est_vmem(Bt) + (6 << 20)              # + compiler scratch headroom
    vmem_limit = int(min(max(need, 32 << 20), limit_cap))
    if need > vmem_limit:
        # TODO(synk): add an L-tiled two-pass GroupNorm path for configs whose
        # single-batch working set exceeds per-core VMEM (very long L on v7x).
        vmem_limit = int(min(need, max(vmem_cap - (4 << 20), limit_cap)))

    kernel = functools.partial(_conv1d_block_kernel, kernel_size=K,
                               approx_recip=approx_reciprocal)
    out = pl.pallas_call(
        kernel,
        out_shape=jax.ShapeDtypeStruct((B, Cout, L), out_dtype),
        grid_spec=pltpu.PrefetchScalarGridSpec(
            num_scalar_prefetch=0,
            grid=(B // Bt,),
            in_specs=[
                pl.BlockSpec((Bt, Cin_p, L), lambda i: (i, 0, 0)),     # x (NCL)
                pl.BlockSpec((Cout, K * Cin_p), lambda i: (0, 0)),     # weight
                pl.BlockSpec((Cout, 1), lambda i: (0, 0)),             # bias
                pl.BlockSpec((Cout, 1), lambda i: (0, 0)),             # gamma
                pl.BlockSpec((Cout, 1), lambda i: (0, 0)),             # beta
                pl.BlockSpec((Cout, Cout), lambda i: (0, 0)),          # group mean op
                pl.BlockSpec((P, Bt), lambda i: (0, 0)),               # segment sum
                pl.BlockSpec((Bt, P), lambda i: (0, 0)),               # broadcast
            ],
            out_specs=pl.BlockSpec((Bt, Cout, L), lambda i: (i, 0, 0)),
        ),
        compiler_params=pltpu.CompilerParams(
            dimension_semantics=("parallel",),
            vmem_limit_bytes=vmem_limit),
    )(x, w2, b_col, g_col, be_col, gmean_mat, seg, bcast)
    return out


def _reference(x_ncl, weight, bias, gamma, beta, *, kernel_size, n_groups):
    """Pure-JAX reference mirroring nn.Conv1d -> nn.GroupNorm -> nn.Mish."""
    pad = kernel_size // 2
    y = lax.conv_general_dilated(
        x_ncl, weight, window_strides=(1,), padding=[(pad, pad)],
        dimension_numbers=("NCH", "OIH", "NCH"),
        precision=lax.Precision.HIGHEST)
    y = y + bias[None, :, None]
    B, C, L = y.shape
    g = n_groups
    yg = y.reshape(B, g, C // g, L)
    mu = jnp.mean(yg, axis=(2, 3), keepdims=True)
    var = jnp.mean((yg - mu) ** 2, axis=(2, 3), keepdims=True)
    yn = ((yg - mu) / jnp.sqrt(var + 1e-5)).reshape(B, C, L)
    yn = yn * gamma[None, :, None] + beta[None, :, None]
    sp = jnp.maximum(yn, 0.0) + jnp.log1p(jnp.exp(-jnp.abs(yn)))
    return yn * jnp.tanh(sp)


if __name__ == "__main__":
    def run_case(key, *, B, Cin, Cout, L, K, G, compute_dtype, out_dtype, tol):
        kx, kw, kb, kg, kbe = jax.random.split(key, 5)
        x = jax.random.normal(kx, (B, Cin, L), jnp.float32)
        weight = 0.1 * jax.random.normal(kw, (Cout, Cin, K), jnp.float32)
        bias = 0.1 * jax.random.normal(kb, (Cout,), jnp.float32)
        gamma = 1.0 + 0.1 * jax.random.normal(kg, (Cout,), jnp.float32)
        beta = 0.1 * jax.random.normal(kbe, (Cout,), jnp.float32)
        ref = _reference(x, weight, bias, gamma, beta,
                         kernel_size=K, n_groups=G)
        out = jax.block_until_ready(conv1d_block(
            x, weight, bias, gamma, beta, kernel_size=K, n_groups=G,
            compute_dtype=compute_dtype, out_dtype=out_dtype))
        assert out.shape == (B, Cout, L)
        assert out.dtype == jnp.dtype(out_dtype)
        ok = jnp.allclose(out.astype(jnp.float32), ref, atol=tol, rtol=tol)
        assert ok, f"mismatch vs reference (tol={tol})"

    root = jax.random.PRNGKey(0)
    k1, k2 = jax.random.split(root)

    # f32 path: exact module semantics (Conv1d -> GroupNorm -> Mish).
    run_case(k1, B=2, Cin=16, Cout=32, L=16, K=3, G=8,
             compute_dtype=jnp.float32, out_dtype=jnp.float32, tol=2e-4)

    # bf16 compute / bf16 output path with unaligned Cin (exercises channel
    # padding) and a larger batch (exercises lane packing with Bt > 1).
    run_case(k2, B=8, Cin=12, Cout=32, L=16, K=5, G=4,
             compute_dtype=jnp.bfloat16, out_dtype=jnp.bfloat16, tol=5e-2)

    print("KERNEL_OK")
</pallas_src>

<mosaic_0001>
module attributes {stable_mosaic.version = 11 : i64} {
  func.func @_conv1d_block_kernel(%arg0: i32, %arg1: memref<1x16x16xf32, #tpu.memory_space<vmem>>, %arg2: memref<32x48xf32, #tpu.memory_space<vmem>>, %arg3: memref<32x1xf32, #tpu.memory_space<vmem>>, %arg4: memref<32x1xf32, #tpu.memory_space<vmem>>, %arg5: memref<32x1xf32, #tpu.memory_space<vmem>>, %arg6: memref<32x32xf32, #tpu.memory_space<vmem>>, %arg7: memref<16x1xf32, #tpu.memory_space<vmem>>, %arg8: memref<1x16xf32, #tpu.memory_space<vmem>>, %arg9: memref<1x32x16xf32, #tpu.memory_space<vmem>>) attributes {dimension_semantics = [#tpu.dimension_semantics<parallel>], iteration_bounds = array<i64: 2>, scalar_prefetch = 0 : i64, scratch_operands = 0 : i64, tpu.core_type = #tpu.core_type<tc>, window_params = [{transform_indices = @transform_0, window_bounds = array<i64: 1, 16, 16>}, {pipeline_mode = #tpu.pipeline_mode<synchronous>, transform_indices = @transform_1, window_bounds = array<i64: 32, 48>}, {pipeline_mode = #tpu.pipeline_mode<synchronous>, transform_indices = @transform_2, window_bounds = array<i64: 32, 1>}, {pipeline_mode = #tpu.pipeline_mode<synchronous>, transform_indices = @transform_3, window_bounds = array<i64: 32, 1>}, {pipeline_mode = #tpu.pipeline_mode<synchronous>, transform_indices = @transform_4, window_bounds = array<i64: 32, 1>}, {pipeline_mode = #tpu.pipeline_mode<synchronous>, transform_indices = @transform_5, window_bounds = array<i64: 32, 32>}, {pipeline_mode = #tpu.pipeline_mode<synchronous>, transform_indices = @transform_6, window_bounds = array<i64: 16, 1>}, {pipeline_mode = #tpu.pipeline_mode<synchronous>, transform_indices = @transform_7, window_bounds = array<i64: 1, 16>}, {transform_indices = @transform_8, window_bounds = array<i64: 1, 32, 16>}]} {
    %c0 = arith.constant 0 : index
    %c0_0 = arith.constant 0 : index
    %0 = vector.load %arg2[%c0, %c0_0] : memref<32x48xf32, #tpu.memory_space<vmem>>, vector<32x48xf32>
    %c0_1 = arith.constant 0 : index
    %c0_2 = arith.constant 0 : index
    %1 = vector.load %arg3[%c0_1, %c0_2] : memref<32x1xf32, #tpu.memory_space<vmem>>, vector<32x1xf32>
    %c0_3 = arith.constant 0 : index
    %c0_4 = arith.constant 0 : index
    %2 = vector.load %arg4[%c0_3, %c0_4] : memref<32x1xf32, #tpu.memory_space<vmem>>, vector<32x1xf32>
    %c0_5 = arith.constant 0 : index
    %c0_6 = arith.constant 0 : index
    %3 = vector.load %arg5[%c0_5, %c0_6] : memref<32x1xf32, #tpu.memory_space<vmem>>, vector<32x1xf32>
    %c0_7 = arith.constant 0 : index
    %c0_8 = arith.constant 0 : index
    %4 = vector.load %arg6[%c0_7, %c0_8] : memref<32x32xf32, #tpu.memory_space<vmem>>, vector<32x32xf32>
    %c0_9 = arith.constant 0 : index
    %c0_10 = arith.constant 0 : index
    %5 = vector.load %arg7[%c0_9, %c0_10] : memref<16x1xf32, #tpu.memory_space<vmem>>, vector<16x1xf32>
    %c0_11 = arith.constant 0 : index
    %c0_12 = arith.constant 0 : index
    %6 = vector.load %arg8[%c0_11, %c0_12] : memref<1x16xf32, #tpu.memory_space<vmem>>, vector<1x16xf32>
    %c0_13 = arith.constant 0 : index
    %c0_14 = arith.constant 0 : index
    %c0_15 = arith.constant 0 : index
    %7 = vector.load %arg1[%c0_13, %c0_14, %c0_15] : memref<1x16x16xf32, #tpu.memory_space<vmem>>, vector<1x16x16xf32>
    %8 = vector.shape_cast %7 : vector<1x16x16xf32> to vector<16x16xf32>
    %9 = tpu.iota {dimensions = array<i32: 1>} : vector<16x16xi32>
    %c16_i32 = arith.constant 16 : i32
    %c0_i32 = arith.constant 0 : i32
    %10 = arith.cmpi eq, %c16_i32, %c0_i32 : i32
    %c1_i32 = arith.constant 1 : i32
    %11 = arith.select %10, %c1_i32, %c16_i32 : i32
    %12 = vector.broadcast %11 : i32 to vector<16x16xi32>
    %13 = arith.remsi %9, %12 : vector<16x16xi32>
    %c0_i32_16 = arith.constant 0 : i32
    %14 = vector.broadcast %c0_i32_16 : i32 to vector<16x16xi32>
    %15 = arith.cmpi ne, %13, %14 : vector<16x16xi32>
    %c0_i32_17 = arith.constant 0 : i32
    %16 = vector.broadcast %c0_i32_17 : i32 to vector<16x16xi32>
    %17 = arith.cmpi slt, %13, %16 : vector<16x16xi32>
    %c0_i32_18 = arith.constant 0 : i32
    %18 = arith.cmpi slt, %11, %c0_i32_18 : i32
    %19 = vector.broadcast %18 : i1 to vector<16x16xi1>
    %20 = vector.broadcast %19 : vector<16x16xi1> to vector<16x16xi1>
    %21 = arith.xori %17, %20 : vector<16x16xi1>
    %22 = arith.andi %21, %15 : vector<16x16xi1>
    %23 = vector.broadcast %11 : i32 to vector<16x16xi32>
    %24 = arith.addi %13, %23 : vector<16x16xi32>
    %25 = arith.select %22, %24, %13 : vector<16x16xi1>, vector<16x16xi32>
    %c1_i32_19 = arith.constant 1 : i32
    %26 = tpu.dynamic_rotate %8 by %c1_i32_19 dim 1 : vector<16x16xf32>, i32 -> vector<16x16xf32>
    %c1_i32_20 = arith.constant 1 : i32
    %27 = vector.broadcast %c1_i32_20 : i32 to vector<16x16xi32>
    %28 = arith.cmpi sge, %25, %27 : vector<16x16xi32>
    %c0_i32_21 = arith.constant 0 : i32
    %29 = arith.sitofp %c0_i32_21 : i32 to f32
    %30 = vector.broadcast %29 : f32 to vector<16x16xf32>
    %31 = arith.select %28, %26, %30 : vector<16x16xi1>, vector<16x16xf32>
    %c15_i32 = arith.constant 15 : i32
    %32 = tpu.dynamic_rotate %8 by %c15_i32 dim 1 : vector<16x16xf32>, i32 -> vector<16x16xf32>
    %c15_i32_22 = arith.constant 15 : i32
    %33 = vector.broadcast %c15_i32_22 : i32 to vector<16x16xi32>
    %34 = arith.cmpi slt, %25, %33 : vector<16x16xi32>
    %c0_i32_23 = arith.constant 0 : i32
    %35 = arith.sitofp %c0_i32_23 : i32 to f32
    %36 = vector.broadcast %35 : f32 to vector<16x16xf32>
    %37 = arith.select %34, %32, %36 : vector<16x16xi1>, vector<16x16xf32>
    %38 = tpu.concatenate %31, %8, %37 in 0 : vector<16x16xf32>, vector<16x16xf32>, vector<16x16xf32> -> vector<48x16xf32>
    %cst = arith.constant dense<0.000000e+00> : vector<32x16xf32>
    %39 = tpu.matmul %0, %38, %cst {dimension_numbers = #tpu.dot_dimension_numbers<[1], [0], [0], [1], [0, 0, 1, 1], [], []>} : vector<32x48xf32>, vector<48x16xf32>, vector<32x16xf32> -> vector<32x16xf32>
    %40 = vector.broadcast %1 : vector<32x1xf32> to vector<32x16xf32>
    %41 = arith.addf %39, %40 : vector<32x16xf32>
    %cst_24 = arith.constant dense<0.000000e+00> : vector<32x1xf32>
    %42 = tpu.matmul %41, %5, %cst_24 {dimension_numbers = #tpu.dot_dimension_numbers<[1], [0], [0], [1], [0, 0, 1, 1], [], []>} : vector<32x16xf32>, vector<16x1xf32>, vector<32x1xf32> -> vector<32x1xf32>
    %cst_25 = arith.constant dense<0.000000e+00> : vector<32x1xf32>
    %43 = tpu.matmul %4, %42, %cst_25 {dimension_numbers = #tpu.dot_dimension_numbers<[1], [0], [0], [1], [0, 0, 1, 1], [], []>} : vector<32x32xf32>, vector<32x1xf32>, vector<32x1xf32> -> vector<32x1xf32>
    %cst_26 = arith.constant dense<0.000000e+00> : vector<32x16xf32>
    %44 = tpu.matmul %43, %6, %cst_26 {dimension_numbers = #tpu.dot_dimension_numbers<[1], [0], [0], [1], [0, 0, 1, 1], [], []>} : vector<32x1xf32>, vector<1x16xf32>, vector<32x16xf32> -> vector<32x16xf32>
    %45 = arith.subf %41, %44 : vector<32x16xf32>
    %46 = arith.mulf %45, %45 : vector<32x16xf32>
    %cst_27 = arith.constant dense<0.000000e+00> : vector<32x1xf32>
    %47 = tpu.matmul %46, %5, %cst_27 {dimension_numbers = #tpu.dot_dimension_numbers<[1], [0], [0], [1], [0, 0, 1, 1], [], []>} : vector<32x16xf32>, vector<16x1xf32>, vector<32x1xf32> -> vector<32x1xf32>
    %cst_28 = arith.constant dense<0.000000e+00> : vector<32x1xf32>
    %48 = tpu.matmul %4, %47, %cst_28 {dimension_numbers = #tpu.dot_dimension_numbers<[1], [0], [0], [1], [0, 0, 1, 1], [], []>} : vector<32x32xf32>, vector<32x1xf32>, vector<32x1xf32> -> vector<32x1xf32>
    %cst_29 = arith.constant 9.99999974E-6 : f32
    %49 = vector.broadcast %cst_29 : f32 to vector<32x1xf32>
    %50 = arith.addf %48, %49 : vector<32x1xf32>
    %51 = math.rsqrt %50 : vector<32x1xf32>
    %52 = arith.mulf %51, %2 : vector<32x1xf32>
    %cst_30 = arith.constant dense<0.000000e+00> : vector<32x16xf32>
    %53 = tpu.matmul %52, %6, %cst_30 {dimension_numbers = #tpu.dot_dimension_numbers<[1], [0], [0], [1], [0, 0, 1, 1], [], []>} : vector<32x1xf32>, vector<1x16xf32>, vector<32x16xf32> -> vector<32x16xf32>
    %54 = arith.mulf %45, %53 : vector<32x16xf32>
    %55 = vector.broadcast %3 : vector<32x1xf32> to vector<32x16xf32>
    %56 = arith.addf %54, %55 : vector<32x16xf32>
    %57 = math.absf %56 : vector<32x16xf32>
    %cst_31 = arith.constant 0.000000e+00 : f32
    %58 = vector.broadcast %cst_31 : f32 to vector<32x16xf32>
    %59 = arith.subf %58, %57 : vector<32x16xf32>
    %60 = math.exp %59 : vector<32x16xf32>
    %cst_32 = arith.constant 0.000000e+00 : f32
    %61 = vector.broadcast %cst_32 : f32 to vector<32x16xf32>
    %62 = arith.cmpf oge, %56, %61 : vector<32x16xf32>
    %63 = arith.addf %60, %60 : vector<32x16xf32>
    %64 = arith.mulf %60, %60 : vector<32x16xf32>
    %cst_33 = arith.constant 1.000000e+00 : f32
    %65 = vector.broadcast %cst_33 : f32 to vector<32x16xf32>
    %66 = arith.addf %65, %63 : vector<32x16xf32>
    %67 = arith.addf %64, %63 : vector<32x16xf32>
    %68 = arith.select %62, %66, %67 : vector<32x16xi1>, vector<32x16xf32>
    %69 = arith.addf %64, %64 : vector<32x16xf32>
    %cst_34 = arith.constant 2.000000e+00 : f32
    %70 = vector.broadcast %cst_34 : f32 to vector<32x16xf32>
    %71 = arith.select %62, %69, %70 : vector<32x16xi1>, vector<32x16xf32>
    %72 = arith.addf %68, %71 : vector<32x16xf32>
    %73 = arith.mulf %56, %68 : vector<32x16xf32>
    %74 = tpu.reciprocal %72 : vector<32x16xf32> -> vector<32x16xf32>
    %75 = arith.mulf %73, %74 : vector<32x16xf32>
    %c0_35 = arith.constant 0 : index
    %c0_36 = arith.constant 0 : index
    %c0_37 = arith.constant 0 : index
    %76 = vector.load %arg9[%c0_35, %c0_36, %c0_37] : memref<1x32x16xf32, #tpu.memory_space<vmem>>, vector<1x32x16xf32>
    %77 = vector.shape_cast %76 : vector<1x32x16xf32> to vector<32x16xf32>
    %78 = vector.shape_cast %75 : vector<32x16xf32> to vector<1x32x16xf32>
    tpu.vector_store %arg9[%c0_35, %c0_36, %c0_37], %78 {strides = array<i32>} : memref<1x32x16xf32, #tpu.memory_space<vmem>>, vector<1x32x16xf32>,
    return
  }
  func.func @transform_0(%arg0: i32) -> (i32, i32, i32) {
    %c0_i32 = arith.constant 0 : i32
    %c0_i32_0 = arith.constant 0 : i32
    %c0_i32_1 = arith.constant 0 : i32
    return %arg0, %c0_i32, %c0_i32_0 : i32, i32, i32
  }
  func.func @transform_1(%arg0: i32) -> (i32, i32) {
    %c0_i32 = arith.constant 0 : i32
    %c0_i32_0 = arith.constant 0 : i32
    %c0_i32_1 = arith.constant 0 : i32
    return %c0_i32, %c0_i32_0 : i32, i32
  }
  func.func @transform_2(%arg0: i32) -> (i32, i32) {
    %c0_i32 = arith.constant 0 : i32
    %c0_i32_0 = arith.constant 0 : i32
    %c0_i32_1 = arith.constant 0 : i32
    return %c0_i32, %c0_i32_0 : i32, i32
  }
  func.func @transform_3(%arg0: i32) -> (i32, i32) {
    %c0_i32 = arith.constant 0 : i32
    %c0_i32_0 = arith.constant 0 : i32
    %c0_i32_1 = arith.constant 0 : i32
    return %c0_i32, %c0_i32_0 : i32, i32
  }
  func.func @transform_4(%arg0: i32) -> (i32, i32) {
    %c0_i32 = arith.constant 0 : i32
    %c0_i32_0 = arith.constant 0 : i32
    %c0_i32_1 = arith.constant 0 : i32
    return %c0_i32, %c0_i32_0 : i32, i32
  }
  func.func @transform_5(%arg0: i32) -> (i32, i32) {
    %c0_i32 = arith.constant 0 : i32
    %c0_i32_0 = arith.constant 0 : i32
    %c0_i32_1 = arith.constant 0 : i32
    return %c0_i32, %c0_i32_0 : i32, i32
  }
  func.func @transform_6(%arg0: i32) -> (i32, i32) {
    %c0_i32 = arith.constant 0 : i32
    %c0_i32_0 = arith.constant 0 : i32
    %c0_i32_1 = arith.constant 0 : i32
    return %c0_i32, %c0_i32_0 : i32, i32
  }
  func.func @transform_7(%arg0: i32) -> (i32, i32) {
    %c0_i32 = arith.constant 0 : i32
    %c0_i32_0 = arith.constant 0 : i32
    %c0_i32_1 = arith.constant 0 : i32
    return %c0_i32, %c0_i32_0 : i32, i32
  }
  func.func @transform_8(%arg0: i32) -> (i32, i32, i32) {
    %c0_i32 = arith.constant 0 : i32
    %c0_i32_0 = arith.constant 0 : i32
    %c0_i32_1 = arith.constant 0 : i32
    return %arg0, %c0_i32, %c0_i32_0 : i32, i32, i32
  }
}

</mosaic_0001>

<llo_original>
// kernel: tpu_custom_call.1
$region0: #{tpu_custom_call.1}
  #allocation0 [shape = 'u32[]', space=smem, size = 0x4, offset = 0x4, fixed_abs, tag = 'smem constant byte address 0x4 - core index']
  #allocation1 [shape = 'u32[144,128]{1,0:T(1,128)}', space=vmem, size = 0x12000, scoped, tag = 'internal scratch']
  %s0 = inlined_call_operand.vmem [shape: f32[2,16,16], index: 0, kind: input, shape index: {}]
  %s1 = inlined_call_operand.vmem [shape: f32[32,48], index: 1, kind: input, shape index: {}]
  %s2 = inlined_call_operand.vmem [shape: f32[32,1], index: 2, kind: input, shape index: {}]
  %s3 = inlined_call_operand.vmem [shape: f32[32,1], index: 3, kind: input, shape index: {}]
  %s4 = inlined_call_operand.vmem [shape: f32[32,1], index: 4, kind: input, shape index: {}]
  %s5 = inlined_call_operand.vmem [shape: f32[32,32], index: 5, kind: input, shape index: {}]
  %s6 = inlined_call_operand.vmem [shape: f32[16,1], index: 6, kind: input, shape index: {}]
  %s7 = inlined_call_operand.vmem [shape: f32[1,16], index: 7, kind: input, shape index: {}]
  %s8 = inlined_call_operand.vmem [shape: f32[2,32,16], index: 8, kind: output, shape index: {}]
  %s9 = sld [smem:[#allocation0]]
  $region65: #{tpu_custom_call.1} parent=0
    _
  %s11 = ssub.s32 1, %s9
  %s12 = scalar_select 0, %s11, %s9
  loop: start=0, step=1, limit=4
  $region2: #{tpu_custom_call.1} parent=0 // loop_pre_header
    _
  $region3: #{tpu_custom_call.1} parent=0 // loop_header
    %s14 = sphi 0, %s18
    %p15 = scmp.ge.s32.totalorder %s14, 4
    %s24 = sphi 0, %s26
    %s27 = sphi 0, %s24
    %s28 = sphi 0, %s27
    %s44 = sphi 0, %s28
    %s48 = sphi 0, %s48
    %s50 = sphi 0, %s48
    %s51 = sphi 0, %s50
    %s65 = sphi 0, %s51
    %s69 = sphi 0, %s69
    %s71 = sphi 0, %s69
    %s72 = sphi 0, %s71
    %s86 = sphi 0, %s72
    %s90 = sphi 0, %s90
    %s92 = sphi 0, %s90
    %s93 = sphi 0, %s92
    %s107 = sphi 0, %s93
    %s111 = sphi 0, %s111
    %s113 = sphi 0, %s111
    %s114 = sphi 0, %s113
    %s128 = sphi 0, %s114
    %s132 = sphi 0, %s132
    %s134 = sphi 0, %s132
    %s135 = sphi 0, %s134
    %s149 = sphi 0, %s135
    %s153 = sphi 0, %s153
    %s155 = sphi 0, %s153
    %s156 = sphi 0, %s155
    %s170 = sphi 0, %s156
    %s174 = sphi 0, %s174
    %s176 = sphi 0, %s174
    %s177 = sphi 0, %s176
    %s191 = sphi 0, %s177
    %s197 = sphi 0, %s199
    %s200 = sphi 0, %s197
    %s201 = sphi 0, %s200
    %s217 = sphi 0, %s201
  $region4: #{tpu_custom_call.1} parent=0 // loop_header_branch
    %17 = sbr.rel (%p15) target = $region8
  $region5: #{tpu_custom_call.1} parent=0 // loop_body
    %s19 = ssub.s32 %s14, 1
    %s20 = ssub.s32 %s14, 2
    %s21 = sadd.s32 %s14, 1
    %s22 = ssub.s32 %s14, %s21
    %p23 = scmp.eq.s32.totalorder %s22, 0
    %s25 = sadd.s32 %s24, 1
    %s26 = scalar_select %p23, %s24, %s25
    %p29 = pneg %p23
    %p30 = scmp.eq.s32.totalorder %s14, 1
    %p31 = por %p29, %p30
    %p32 = scmp.ne.s32.totalorder %s24, %s27
    %p33 = scmp.eq.s32.totalorder %s14, 0
    %p34 = por %p32, %p33
    %p35 = scmp.ne.s32.totalorder %s24, %s27
    %p36 = scmp.eq.s32.totalorder %s19, 1
    %p37 = por %p35, %p36
    %p38 = scmp.ne.s32.totalorder %s27, %s28
    %p39 = scmp.eq.s32.totalorder %s19, 0
    %p40 = por %p38, %p39
    %p41 = scmp.ne.s32.totalorder %s27, %s28
    %p42 = scmp.eq.s32.totalorder %s20, 1
    %p43 = por %p41, %p42
    %p45 = scmp.ne.s32.totalorder %s28, %s44
    %p46 = scmp.eq.s32.totalorder %s20, 0
    %p47 = por %p45, %p46
    %s49 = sadd.s32 %s48, 1
    %p52 = scmp.eq.s32.totalorder %s14, 1
    %p53 = scmp.ne.s32.totalorder %s48, %s50
    %p54 = scmp.eq.s32.totalorder %s14, 0
    %p55 = por %p53, %p54
    %p56 = scmp.ne.s32.totalorder %s48, %s50
    %p57 = scmp.eq.s32.totalorder %s19, 1
    %p58 = por %p56, %p57
    %p59 = scmp.ne.s32.totalorder %s50, %s51
    %p60 = scmp.eq.s32.totalorder %s19, 0
    %p61 = por %p59, %p60
    %p62 = scmp.ne.s32.totalorder %s50, %s51
    %p63 = scmp.eq.s32.totalorder %s20, 1
    %p64 = por %p62, %p63
    %p66 = scmp.ne.s32.totalorder %s51, %s65
    %p67 = scmp.eq.s32.totalorder %s20, 0
    %p68 = por %p66, %p67
    %s70 = sadd.s32 %s69, 1
    %p73 = scmp.eq.s32.totalorder %s14, 1
    %p74 = scmp.ne.s32.totalorder %s69, %s71
    %p75 = scmp.eq.s32.totalorder %s14, 0
    %p76 = por %p74, %p75
    %p77 = scmp.ne.s32.totalorder %s69, %s71
    %p78 = scmp.eq.s32.totalorder %s19, 1
    %p79 = por %p77, %p78
    %p80 = scmp.ne.s32.totalorder %s71, %s72
    %p81 = scmp.eq.s32.totalorder %s19, 0
    %p82 = por %p80, %p81
    %p83 = scmp.ne.s32.totalorder %s71, %s72
    %p84 = scmp.eq.s32.totalorder %s20, 1
    %p85 = por %p83, %p84
    %p87 = scmp.ne.s32.totalorder %s72, %s86
    %p88 = scmp.eq.s32.totalorder %s20, 0
    %p89 = por %p87, %p88
    %s91 = sadd.s32 %s90, 1
    %p94 = scmp.eq.s32.totalorder %s14, 1
    %p95 = scmp.ne.s32.totalorder %s90, %s92
    %p96 = scmp.eq.s32.totalorder %s14, 0
    %p97 = por %p95, %p96
    %p98 = scmp.ne.s32.totalorder %s90, %s92
    %p99 = scmp.eq.s32.totalorder %s19, 1
    %p100 = por %p98, %p99
    %p101 = scmp.ne.s32.totalorder %s92, %s93
    %p102 = scmp.eq.s32.totalorder %s19, 0
    %p103 = por %p101, %p102
    %p104 = scmp.ne.s32.totalorder %s92, %s93
    %p105 = scmp.eq.s32.totalorder %s20, 1
    %p106 = por %p104, %p105
    %p108 = scmp.ne.s32.totalorder %s93, %s107
    %p109 = scmp.eq.s32.totalorder %s20, 0
    %p110 = por %p108, %p109
    %s112 = sadd.s32 %s111, 1
    %p115 = scmp.eq.s32.totalorder %s14, 1
    %p116 = scmp.ne.s32.totalorder %s111, %s113
    %p117 = scmp.eq.s32.totalorder %s14, 0
    %p118 = por %p116, %p117
    %p119 = scmp.ne.s32.totalorder %s111, %s113
    %p120 = scmp.eq.s32.totalorder %s19, 1
    %p121 = por %p119, %p120
    %p122 = scmp.ne.s32.totalorder %s113, %s114
    %p123 = scmp.eq.s32.totalorder %s19, 0
    %p124 = por %p122, %p123
    %p125 = scmp.ne.s32.totalorder %s113, %s114
    %p126 = scmp.eq.s32.totalorder %s20, 1
    %p127 = por %p125, %p126
    %p129 = scmp.ne.s32.totalorder %s114, %s128
    %p130 = scmp.eq.s32.totalorder %s20, 0
    %p131 = por %p129, %p130
    %s133 = sadd.s32 %s132, 1
    %p136 = scmp.eq.s32.totalorder %s14, 1
    %p137 = scmp.ne.s32.totalorder %s132, %s134
    %p138 = scmp.eq.s32.totalorder %s14, 0
    %p139 = por %p137, %p138
    %p140 = scmp.ne.s32.totalorder %s132, %s134
    %p141 = scmp.eq.s32.totalorder %s19, 1
    %p142 = por %p140, %p141
    %p143 = scmp.ne.s32.totalorder %s134, %s135
    %p144 = scmp.eq.s32.totalorder %s19, 0
    %p145 = por %p143, %p144
    %p146 = scmp.ne.s32.totalorder %s134, %s135
    %p147 = scmp.eq.s32.totalorder %s20, 1
    %p148 = por %p146, %p147
    %p150 = scmp.ne.s32.totalorder %s135, %s149
    %p151 = scmp.eq.s32.totalorder %s20, 0
    %p152 = por %p150, %p151
    %s154 = sadd.s32 %s153, 1
    %p157 = scmp.eq.s32.totalorder %s14, 1
    %p158 = scmp.ne.s32.totalorder %s153, %s155
    %p159 = scmp.eq.s32.totalorder %s14, 0
    %p160 = por %p158, %p159
    %p161 = scmp.ne.s32.totalorder %s153, %s155
    %p162 = scmp.eq.s32.totalorder %s19, 1
    %p163 = por %p161, %p162
    %p164 = scmp.ne.s32.totalorder %s155, %s156
    %p165 = scmp.eq.s32.totalorder %s19, 0
    %p166 = por %p164, %p165
    %p167 = scmp.ne.s32.totalorder %s155, %s156
    %p168 = scmp.eq.s32.totalorder %s20, 1
    %p169 = por %p167, %p168
    %p171 = scmp.ne.s32.totalorder %s156, %s170
    %p172 = scmp.eq.s32.totalorder %s20, 0
    %p173 = por %p171, %p172
    %s175 = sadd.s32 %s174, 1
    %p178 = scmp.eq.s32.totalorder %s14, 1
    %p179 = scmp.ne.s32.totalorder %s174, %s176
    %p180 = scmp.eq.s32.totalorder %s14, 0
    %p181 = por %p179, %p180
    %p182 = scmp.ne.s32.totalorder %s174, %s176
    %p183 = scmp.eq.s32.totalorder %s19, 1
    %p184 = por %p182, %p183
    %p185 = scmp.ne.s32.totalorder %s176, %s177
    %p186 = scmp.eq.s32.totalorder %s19, 0
    %p187 = por %p185, %p186
    %p188 = scmp.ne.s32.totalorder %s176, %s177
    %p189 = scmp.eq.s32.totalorder %s20, 1
    %p190 = por %p188, %p189
    %p192 = scmp.ne.s32.totalorder %s177, %s191
    %p193 = scmp.eq.s32.totalorder %s20, 0
    %p194 = por %p192, %p193
    %s195 = ssub.s32 %s14, %s21
    %p196 = scmp.eq.s32.totalorder %s195, 0
    %s198 = sadd.s32 %s197, 1
    %s199 = scalar_select %p196, %s197, %s198
    %p202 = pneg %p196
    %p203 = scmp.eq.s32.totalorder %s14, 1
    %p204 = por %p202, %p203
    %p205 = scmp.ne.s32.totalorder %s197, %s200
    %p206 = scmp.eq.s32.totalorder %s14, 0
    %p207 = por %p205, %p206
    %p208 = scmp.ne.s32.totalorder %s197, %s200
    %p209 = scmp.eq.s32.totalorder %s19, 1
    %p210 = por %p208, %p209
    %p211 = scmp.ne.s32.totalorder %s200, %s201
    %p212 = scmp.eq.s32.totalorder %s19, 0
    %p213 = por %p211, %p212
    %p214 = scmp.ne.s32.totalorder %s200, %s201
    %p215 = scmp.eq.s32.totalorder %s20, 1
    %p216 = por %p214, %p215
    %p218 = scmp.ne.s32.totalorder %s201, %s217
    %p219 = scmp.eq.s32.totalorder %s20, 0
    %p220 = por %p218, %p219
    %p221 = scmp.le.s32.totalorder 1, %s14
    %p222 = scmp.lt.s32.totalorder %s14, 3
    %p223 = pnand %p221, %p222
    %p224 = pneg %p223
    // Predicated region
    $region9: #{tpu_custom_call.1} parent=5 // pred_check
      _
    $region10: #{tpu_custom_call.1} parent=5 // pred_check_branch
      %226 = sbr.rel (%p223) target = $region12
    $region11: #{tpu_custom_call.1} parent=5 // pred_region
      %s227 = ssub.s32 %s14, 1
      // Predicated region
      $region13: #{tpu_custom_call.1} parent=11 // pred_check
        %p228 = pneg %p61
      $region14: #{tpu_custom_call.1} parent=11 // pred_check_branch
        %230 = sbr.rel (%p228) target = $region16
      $region15: #{tpu_custom_call.1} parent=11 // pred_region
        _
      $region16: #{tpu_custom_call.1} parent=11 // pred_fallthru
        _
      // Predicated region
      $region17: #{tpu_custom_call.1} parent=11 // pred_check
        %p231 = pneg %p82
      $region18: #{tpu_custom_call.1} parent=11 // pred_check_branch
        %233 = sbr.rel (%p231) target = $region20
      $region19: #{tpu_custom_call.1} parent=11 // pred_region
        _
      $region20: #{tpu_custom_call.1} parent=11 // pred_fallthru
        _
      // Predicated region
      $region21: #{tpu_custom_call.1} parent=11 // pred_check
        %p234 = pneg %p103
      $region22: #{tpu_custom_call.1} parent=11 // pred_check_branch
        %236 = sbr.rel (%p234) target = $region24
      $region23: #{tpu_custom_call.1} parent=11 // pred_region
        _
      $region24: #{tpu_custom_call.1} parent=11 // pred_fallthru
        _
      // Predicated region
      $region25: #{tpu_custom_call.1} parent=11 // pred_check
        %p237 = pneg %p124
      $region26: #{tpu_custom_call.1} parent=11 // pred_check_branch
        %239 = sbr.rel (%p237) target = $region28
      $region27: #{tpu_custom_call.1} parent=11 // pred_region
        _
      $region28: #{tpu_custom_call.1} parent=11 // pred_fallthru
        _
      // Predicated region
      $region29: #{tpu_custom_call.1} parent=11 // pred_check
        %p240 = pneg %p145
      $region30: #{tpu_custom_call.1} parent=11 // pred_check_branch
        %242 = sbr.rel (%p240) target = $region32
      $region31: #{tpu_custom_call.1} parent=11 // pred_region
        _
      $region32: #{tpu_custom_call.1} parent=11 // pred_fallthru
        _
      // Predicated region
      $region33: #{tpu_custom_call.1} parent=11 // pred_check
        %p243 = pneg %p166
      $region34: #{tpu_custom_call.1} parent=11 // pred_check_branch
        %245 = sbr.rel (%p243) target = $region36
      $region35: #{tpu_custom_call.1} parent=11 // pred_region
        _
      $region36: #{tpu_custom_call.1} parent=11 // pred_fallthru
        _
      // Predicated region
      $region37: #{tpu_custom_call.1} parent=11 // pred_check
        %p246 = pneg %p187
      $region38: #{tpu_custom_call.1} parent=11 // pred_check_branch
        %248 = sbr.rel (%p246) target = $region40
      $region39: #{tpu_custom_call.1} parent=11 // pred_region
        _
      $region40: #{tpu_custom_call.1} parent=11 // pred_fallthru
        _
    $region12: #{tpu_custom_call.1} parent=5 // pred_fallthru
      _
    %p249 = scmp.lt.s32.totalorder %s14, 2
    // Predicated region
    $region41: #{tpu_custom_call.1} parent=5 // pred_check
      %p250 = pneg %p249
    $region42: #{tpu_custom_call.1} parent=5 // pred_check_branch
      %252 = sbr.rel (%p250) target = $region44
    $region43: #{tpu_custom_call.1} parent=5 // pred_region
      // Predicated region
      $region45: #{tpu_custom_call.1} parent=43 // pred_check
        %p253 = pneg %p34
      $region46: #{tpu_custom_call.1} parent=43 // pred_check_branch
        %255 = sbr.rel (%p253) target = $region48
      $region47: #{tpu_custom_call.1} parent=43 // pred_region
        %p256 = scmp.lt.s32.totalorder %s14, 1
        %s257 = scalar_select %p256, %s14, 1
        %s258 = smul.addr %s257, 2
        %s259 = smul.addr %s258, 8
        %s260 = scalar_lea.vmem %s0, %s259
      $region48: #{tpu_custom_call.1} parent=43 // pred_fallthru
        _
    $region44: #{tpu_custom_call.1} parent=5 // pred_fallthru
      _
    %p261 = scmp.le.s32.totalorder 1, %s14
    %p262 = scmp.lt.s32.totalorder %s14, 3
    %p263 = pnand %p261, %p262
    %p264 = pneg %p263
    // Predicated region
    $region49: #{tpu_custom_call.1} parent=5 // pred_check
      _
    $region50: #{tpu_custom_call.1} parent=5 // pred_check_branch
      %266 = sbr.rel (%p263) target = $region52
    $region51: #{tpu_custom_call.1} parent=5 // pred_region
      %s267 = ssub.s32 %s14, 1
      %p268 = scmp.lt.s32.totalorder %s19, 1
      %s269 = scalar_select %p268, %s19, 1
      %s270 = smul.addr %s269, 2
      %s271 = smul.addr %s270, 8
      %s272 = scalar_lea.vmem %s0, %s271
      %p273 = pneg %p40
      %p274 = pneg %p37
      %p275 = pneg %p61
      %p276 = pneg %p58
      %p277 = pneg %p82
      %p278 = pneg %p79
      %p279 = pneg %p103
      %p280 = pneg %p100
      %p281 = pneg %p124
      %p282 = pneg %p121
      %p283 = pneg %p145
      %p284 = pneg %p142
      %p285 = pneg %p166
      %p286 = pneg %p163
      %p287 = pneg %p187
      %p288 = pneg %p184
      %p289 = pneg %p213
      %p290 = pneg %p210
      %p291 = scmp.lt.s32.totalorder %s19, 1
      %s292 = scalar_select %p291, %s19, 1
      %s293 = smul.addr %s292, 4
      %s294 = smul.addr %s293, 8
      %s295 = scalar_lea.vmem %s8, %s294
      %p296 = scmp.lt.s32.totalorder %s19, 1
      %s297 = scalar_select %p296, %s19, 1
      %s298 = smul.addr %s297, 2
      %s299 = smul.addr %s298, 8
      %s300 = scalar_lea.vmem %s0, %s299
      %p301 = scmp.lt.s32.totalorder %s19, 1
      %s302 = scalar_select %p301, %s19, 1
      %s303 = smul.addr %s302, 4
      %s304 = smul.addr %s303, 8
      %s305 = scalar_lea.vmem %s8, %s304
      %v306 = vld [vmem:[%s1] sm:$0xff]
      %v307 = vld [vmem:[%s1 + $0x8] sm:$0xff]
      %v308 = vld [vmem:[%s1 + $0x10] sm:$0xff]
      %v309 = vld [vmem:[%s1 + $0x18] sm:$0xff]
      %v310 = vld [vmem:[%s2] sm:$0xff]
      %v311 = vld [vmem:[%s2 + $0x8] sm:$0xff]
      %v312 = vld [vmem:[%s2 + $0x10] sm:$0xff]
      %v313 = vld [vmem:[%s2 + $0x18] sm:$0xff]
      %v314 = vld [vmem:[%s3] sm:$0xff]
      %v315 = vld [vmem:[%s3 + $0x8] sm:$0xff]
      %v316 = vld [vmem:[%s3 + $0x10] sm:$0xff]
      %v317 = vld [vmem:[%s3 + $0x18] sm:$0xff]
      %v318 = vld [vmem:[%s4] sm:$0xff]
      %v319 = vld [vmem:[%s4 + $0x8] sm:$0xff]
      %v320 = vld [vmem:[%s4 + $0x10] sm:$0xff]
      %v321 = vld [vmem:[%s4 + $0x18] sm:$0xff]
      %v322 = vld [vmem:[%s5] sm:$0xff]
      %v323 = vld [vmem:[%s5 + $0x8] sm:$0xff]
      %v324 = vld [vmem:[%s5 + $0x10] sm:$0xff]
      %v325 = vld [vmem:[%s5 + $0x18] sm:$0xff]
      %v326 = vld [vmem:[%s6] sm:$0xff]
      %v327 = vld [vmem:[%s6 + $0x8] sm:$0xff]
      %v328 = vld [vmem:[%s7] sm:$0x1]
      %v329 = vld [vmem:[%s300] sm:$0xff]
      %v330 = vld [vmem:[%s300 + $0x8] sm:$0xff]
      %v331 = vlaneseq
      %v332 = vand.u32 %v331, 127
      %vm333 = vcmp.lt.s32.totalorder %v332, 0
      %v334 = vsub.s32 0, %v332
      %v335 = vsel %vm333, %v334, %v332
      %v336 = vshrl.u32 %v335, 4
      %v337 = vand.u32 %v335, 15
      %v338 = vsub.s32 0, %v337
      %v339 = vsel %vm333, %v338, %v337
      %vm340 = vcmp.ne.s32.totalorder %v339, 0
      %vm341 = vcmp.lt.s32.totalorder %v339, 0
      %vm342 = vmand %vm341, %vm340
      %v343 = vadd.s32 %v339, 16
      %v344 = vsel %vm342, %v343, %v339
      %vm345 = vcmask 1047680
      %346 = vrot.lane.b32.xlu0 %v329, 16
      %v347 = vpop.permute.xlu0 %346
      %v348 = vsel %vm345, %v347, %v329
      %349 = vrot.lane.b32.xlu0 %v330, 16
      %v350 = vpop.permute.xlu0 %349
      %v351 = vsel %vm345, %v350, %v330
      %352 = vrot.lane.b32.xlu0 %v348, 16
      %v353 = vpop.permute.xlu0 %352
      %354 = vrot.lane.b32.xlu0 %v351, 16
      %v355 = vpop.permute.xlu0 %354
      %v356 = vsel %vm345, %v353, %v329
      %v357 = vsel %vm345, %v355, %v330
      %vm358 = vcmp.ge.s32.totalorder %v344, 1
      %361 = vrot.lane.b32.xlu0 %v356, 113
      %v362 = vpop.permute.xlu0 %361
      %363 = vrot.lane.b32.xlu0 %v357, 113
      %v364 = vpop.permute.xlu0 %363
      %v367 = vsel %vm358, %v362, 0.0
      %v368 = vsel %vm358, %v364, 0.0
      %vm369 = vcmp.lt.s32.totalorder %v344, 15
      %370 = vrot.lane.b32.xlu0 %v356, 127
      %v371 = vpop.permute.xlu0 %370
      %372 = vrot.lane.b32.xlu0 %v357, 127
      %v373 = vpop.permute.xlu0 %372
      %v376 = vsel %vm369, %v371, 0.0
      %v377 = vsel %vm369, %v373, 0.0
      %379 = vset.pattern.permute.xlu0 0
      %380 = vperm.xlu0 %379, %v310
      %v381 = vpop.permute.xlu0 %380
      %384 = vset.pattern.permute.xlu0 0
      %385 = vperm.xlu0 %384, %v311
      %v386 = vpop.permute.xlu0 %385
      %389 = vset.pattern.permute.xlu0 0
      %390 = vperm.xlu0 %389, %v312
      %v391 = vpop.permute.xlu0 %390
      %394 = vset.pattern.permute.xlu0 0
      %395 = vperm.xlu0 %394, %v313
      %v396 = vpop.permute.xlu0 %395
      %vm398 = vcmask 392192
      %v400 = vsel %vm398, %v306, 0
      %v403 = vsel %vm398, %v307, 0
      %v406 = vsel %vm398, %v308, 0
      %v409 = vsel %vm398, %v309, 0
      %411 = vmatprep.subr.mxu0 0.0
      %412 = vmatpush1.msra.mxu0 %v367
      %413 = vmatprep.subr.mxu0 0.0
      %414 = vmatpush1.msra.mxu0 %v368
      %415 = vmatprep.subr.mxu0 0.0
      %416 = vmatpush1.msra.mxu0 %v329
      %417 = vmatprep.subr.mxu0 0.0
      %418 = vmatpush1.msra.mxu0 %v330
      %419 = vmatprep.subr.mxu0 0.0
      %420 = vmatpush1.msra.mxu0 %v376
      %421 = vmatprep.subr.mxu0 0.0
      %422 = vmatpush1.msra.mxu0 %v377
      %423 = vmatprep.subr.mxu0 0.0
      %424 = vmatpush1.msra.mxu0 0.0
      %425 = vmatprep.subr.mxu0 0.0
      %426 = vmatpush1.msra.mxu0 0.0
      %427 = vmatprep.subr.mxu0 0.0
      %428 = vmatpush1.msra.mxu0 0.0
      %429 = vmatprep.subr.mxu0 0.0
      %430 = vmatpush1.msra.mxu0 0.0
      %431 = vmatprep.subr.mxu0 0.0
      %432 = vmatpush1.msra.mxu0 0.0
      %433 = vmatprep.subr.mxu0 0.0
      %434 = vmatpush1.msra.mxu0 0.0
      %435 = vmatprep.subr.mxu0 0.0
      %436 = vmatpush1.msra.mxu0 0.0
      %437 = vmatprep.subr.mxu0 0.0
      %438 = vmatpush1.msra.mxu0 0.0
      %439 = vmatprep.subr.mxu0 0.0
      %440 = vmatpush1.msra.mxu0 0.0
      %441 = vmatprep.subr.mxu0 0.0
      %442 = vmatpush1.msra.mxu0 0.0
      %443 = vmatprep.subr.mxu0 0.0
      %444 = vmatpush1.msra.mxu0 0.0
      %445 = vmatprep.subr.mxu0 0.0
      %446 = vmatpush1.msra.mxu0 0.0
      %447 = vmatprep.subr.mxu0 0.0
      %448 = vmatpush1.msra.mxu0 0.0
      %449 = vmatprep.subr.mxu0 0.0
      %450 = vmatpush1.msra.mxu0 0.0
      %451 = vmatprep.subr.mxu0 0.0
      %452 = vmatpush1.msra.mxu0 0.0
      %453 = vmatprep.subr.mxu0 0.0
      %454 = vmatpush1.msra.mxu0 0.0
      %455 = vmatprep.subr.mxu0 0.0
      %456 = vmatpush1.msra.mxu0 0.0
      %457 = vmatprep.subr.mxu0 0.0
      %458 = vmatpush1.msra.mxu0 0.0
      %459 = vmatprep.subr.mxu0 0.0
      %460 = vmatpush1.msra.mxu0 0.0
      %461 = vmatprep.subr.mxu0 0.0
      %462 = vmatpush1.msra.mxu0 0.0
      %463 = vmatprep.subr.mxu0 0.0
      %464 = vmatpush1.msra.mxu0 0.0
      %465 = vmatprep.subr.mxu0 0.0
      %466 = vmatpush1.msra.mxu0 0.0
      %467 = vmatprep.subr.mxu0 0.0
      %468 = vmatpush1.msra.mxu0 0.0
      %469 = vmatprep.subr.mxu0 0.0
      %470 = vmatpush1.msra.mxu0 0.0
      %471 = vmatprep.subr.mxu0 0.0
      %472 = vmatpush1.msra.mxu0 0.0
      %473 = vmatprep.subr.mxu0 0.0
      %474 = vmatpush1.msra.mxu0 0.0
      %475 = vmatprep.mubr.f32.mxu0 0.0
      %476 = vmatmul.mubr.f32.gmra.mrb[0].mxu0 %v400
      %v477 = vpop.f32.mrb[0].mxu0
      %v478 = vadd.f32 %v381, %v477
      %v479 = vpop.f32.mrb[0].mxu0
      %480 = vmatprep.mubr.f32.mxu0 0.0
      %481 = vmatmul.mubr.f32.gmra.mrb[0].mxu0 %v403
      %v482 = vpop.f32.mrb[0].mxu0
      %v483 = vadd.f32 %v386, %v482
      %v484 = vpop.f32.mrb[0].mxu0
      %485 = vmatprep.mubr.f32.mxu0 0.0
      %486 = vmatmul.mubr.f32.gmra.mrb[0].mxu0 %v406
      %v487 = vpop.f32.mrb[0].mxu0
      %v488 = vadd.f32 %v391, %v487
      %v489 = vpop.f32.mrb[0].mxu0
      %490 = vmatprep.mubr.f32.mxu0 0.0
      %491 = vmatmul.mubr.f32.gmra.mrb[0].mxu0 %v409
      %v492 = vpop.f32.mrb[0].mxu0
      %v493 = vadd.f32 %v396, %v492
      %v494 = vpop.f32.mrb[0].mxu0
      %495 = vdwg.mxu0
      %vm496 = vcmask 130048
      %v498 = vsel %vm496, %v478, 0
      %v501 = vsel %vm496, %v483, 0
      %v504 = vsel %vm496, %v488, 0
      %v507 = vsel %vm496, %v493, 0
      %509 = vmatprep.subr.mxu0 0.0
      %510 = vmatpush1.msra.mxu0 %v326
      %511 = vmatprep.subr.mxu0 0.0
      %512 = vmatpush1.msra.mxu0 %v327
      %513 = vmatprep.subr.mxu0 0.0
      %514 = vmatpush1.msra.mxu0 0.0
      %515 = vmatprep.subr.mxu0 0.0
      %516 = vmatpush1.msra.mxu0 0.0
      %517 = vmatprep.subr.mxu0 0.0
      %518 = vmatpush1.msra.mxu0 0.0
      %519 = vmatprep.subr.mxu0 0.0
      %520 = vmatpush1.msra.mxu0 0.0
      %521 = vmatprep.subr.mxu0 0.0
      %522 = vmatpush1.msra.mxu0 0.0
      %523 = vmatprep.subr.mxu0 0.0
      %524 = vmatpush1.msra.mxu0 0.0
      %525 = vmatprep.subr.mxu0 0.0
      %526 = vmatpush1.msra.mxu0 0.0
      %527 = vmatprep.subr.mxu0 0.0
      %528 = vmatpush1.msra.mxu0 0.0
      %529 = vmatprep.subr.mxu0 0.0
      %530 = vmatpush1.msra.mxu0 0.0
      %531 = vmatprep.subr.mxu0 0.0
      %532 = vmatpush1.msra.mxu0 0.0
      %533 = vmatprep.subr.mxu0 0.0
      %534 = vmatpush1.msra.mxu0 0.0
      %535 = vmatprep.subr.mxu0 0.0
      %536 = vmatpush1.msra.mxu0 0.0
      %537 = vmatprep.subr.mxu0 0.0
      %538 = vmatpush1.msra.mxu0 0.0
      %539 = vmatprep.subr.mxu0 0.0
      %540 = vmatpush1.msra.mxu0 0.0
      %541 = vmatprep.subr.mxu0 0.0
      %542 = vmatpush1.msra.mxu0 0.0
      %543 = vmatprep.subr.mxu0 0.0
      %544 = vmatpush1.msra.mxu0 0.0
      %545 = vmatprep.subr.mxu0 0.0
      %546 = vmatpush1.msra.mxu0 0.0
      %547 = vmatprep.subr.mxu0 0.0
      %548 = vmatpush1.msra.mxu0 0.0
      %549 = vmatprep.subr.mxu0 0.0
      %550 = vmatpush1.msra.mxu0 0.0
      %551 = vmatprep.subr.mxu0 0.0
      %552 = vmatpush1.msra.mxu0 0.0
      %553 = vmatprep.subr.mxu0 0.0
      %554 = vmatpush1.msra.mxu0 0.0
      %555 = vmatprep.subr.mxu0 0.0
      %556 = vmatpush1.msra.mxu0 0.0
      %557 = vmatprep.subr.mxu0 0.0
      %558 = vmatpush1.msra.mxu0 0.0
      %559 = vmatprep.subr.mxu0 0.0
      %560 = vmatpush1.msra.mxu0 0.0
      %561 = vmatprep.subr.mxu0 0.0
      %562 = vmatpush1.msra.mxu0 0.0
      %563 = vmatprep.subr.mxu0 0.0
      %564 = vmatpush1.msra.mxu0 0.0
      %565 = vmatprep.subr.mxu0 0.0
      %566 = vmatpush1.msra.mxu0 0.0
      %567 = vmatprep.subr.mxu0 0.0
      %568 = vmatpush1.msra.mxu0 0.0
      %569 = vmatprep.subr.mxu0 0.0
      %570 = vmatpush1.msra.mxu0 0.0
      %571 = vmatprep.subr.mxu0 0.0
      %572 = vmatpush1.msra.mxu0 0.0
      %573 = vmatprep.mubr.f32.mxu0 0.0
      %574 = vmatmul.mubr.f32.gmra.mrb[0].mxu0 %v498
      %v575 = vpop.f32.mrb[0].mxu0
      %v576 = vadd.f32 0.0, %v575
      %v577 = vpop.f32.mrb[0].mxu0
      %578 = vmatprep.mubr.f32.mxu0 0.0
      %579 = vmatmul.mubr.f32.gmra.mrb[0].mxu0 %v501
      %v580 = vpop.f32.mrb[0].mxu0
      %v581 = vadd.f32 0.0, %v580
      %v582 = vpop.f32.mrb[0].mxu0
      %583 = vmatprep.mubr.f32.mxu0 0.0
      %584 = vmatmul.mubr.f32.gmra.mrb[0].mxu0 %v504
      %v585 = vpop.f32.mrb[0].mxu0
      %v586 = vadd.f32 0.0, %v585
      %v587 = vpop.f32.mrb[0].mxu0
      %588 = vmatprep.mubr.f32.mxu0 0.0
      %589 = vmatmul.mubr.f32.gmra.mrb[0].mxu0 %v507
      %v590 = vpop.f32.mrb[0].mxu0
      %v591 = vadd.f32 0.0, %v590
      %v592 = vpop.f32.mrb[0].mxu0
      %593 = vdwg.mxu0
      %vm594 = vcmask 261120
      %v596 = vsel %vm594, %v322, 0
      %v599 = vsel %vm594, %v323, 0
      %v602 = vsel %vm594, %v324, 0
      %v605 = vsel %vm594, %v325, 0
      %607 = vmatprep.subr.mxu0 0.0
      %608 = vmatpush1.msra.mxu0 %v576
      %609 = vmatprep.subr.mxu0 0.0
      %610 = vmatpush1.msra.mxu0 %v581
      %611 = vmatprep.subr.mxu0 0.0
      %612 = vmatpush1.msra.mxu0 %v586
      %613 = vmatprep.subr.mxu0 0.0
      %614 = vmatpush1.msra.mxu0 %v591
      %615 = vmatprep.subr.mxu0 0.0
      %616 = vmatpush1.msra.mxu0 0.0
      %617 = vmatprep.subr.mxu0 0.0
      %618 = vmatpush1.msra.mxu0 0.0
      %619 = vmatprep.subr.mxu0 0.0
      %620 = vmatpush1.msra.mxu0 0.0
      %621 = vmatprep.subr.mxu0 0.0
      %622 = vmatpush1.msra.mxu0 0.0
      %623 = vmatprep.subr.mxu0 0.0
      %624 = vmatpush1.msra.mxu0 0.0
      %625 = vmatprep.subr.mxu0 0.0
      %626 = vmatpush1.msra.mxu0 0.0
      %627 = vmatprep.subr.mxu0 0.0
      %628 = vmatpush1.msra.mxu0 0.0
      %629 = vmatprep.subr.mxu0 0.0
      %630 = vmatpush1.msra.mxu0 0.0
      %631 = vmatprep.subr.mxu0 0.0
      %632 = vmatpush1.msra.mxu0 0.0
      %633 = vmatprep.subr.mxu0 0.0
      %634 = vmatpush1.msra.mxu0 0.0
      %635 = vmatprep.subr.mxu0 0.0
      %636 = vmatpush1.msra.mxu0 0.0
      %637 = vmatprep.subr.mxu0 0.0
      %638 = vmatpush1.msra.mxu0 0.0
      %639 = vmatprep.subr.mxu0 0.0
      %640 = vmatpush1.msra.mxu0 0.0
      %641 = vmatprep.subr.mxu0 0.0
      %642 = vmatpush1.msra.mxu0 0.0
      %643 = vmatprep.subr.mxu0 0.0
      %644 = vmatpush1.msra.mxu0 0.0
      %645 = vmatprep.subr.mxu0 0.0
      %646 = vmatpush1.msra.mxu0 0.0
      %647 = vmatprep.subr.mxu0 0.0
      %648 = vmatpush1.msra.mxu0 0.0
      %649 = vmatprep.subr.mxu0 0.0
      %650 = vmatpush1.msra.mxu0 0.0
      %651 = vmatprep.subr.mxu0 0.0
      %652 = vmatpush1.msra.mxu0 0.0
      %653 = vmatprep.subr.mxu0 0.0
      %654 = vmatpush1.msra.mxu0 0.0
      %655 = vmatprep.subr.mxu0 0.0
      %656 = vmatpush1.msra.mxu0 0.0
      %657 = vmatprep.subr.mxu0 0.0
      %658 = vmatpush1.msra.mxu0 0.0
      %659 = vmatprep.subr.mxu0 0.0
      %660 = vmatpush1.msra.mxu0 0.0
      %661 = vmatprep.subr.mxu0 0.0
      %662 = vmatpush1.msra.mxu0 0.0
      %663 = vmatprep.subr.mxu0 0.0
      %664 = vmatpush1.msra.mxu0 0.0
      %665 = vmatprep.subr.mxu0 0.0
      %666 = vmatpush1.msra.mxu0 0.0
      %667 = vmatprep.subr.mxu0 0.0
      %668 = vmatpush1.msra.mxu0 0.0
      %669 = vmatprep.subr.mxu0 0.0
      %670 = vmatpush1.msra.mxu0 0.0
      %671 = vmatprep.mubr.f32.mxu0 0.0
      %672 = vmatmul.mubr.f32.gmra.mrb[0].mxu0 %v596
      %v673 = vpop.f32.mrb[0].mxu0
      %v674 = vadd.f32 0.0, %v673
      %v675 = vpop.f32.mrb[0].mxu0
      %676 = vmatprep.mubr.f32.mxu0 0.0
      %677 = vmatmul.mubr.f32.gmra.mrb[0].mxu0 %v599
      %v678 = vpop.f32.mrb[0].mxu0
      %v679 = vadd.f32 0.0, %v678
      %v680 = vpop.f32.mrb[0].mxu0
      %681 = vmatprep.mubr.f32.mxu0 0.0
      %682 = vmatmul.mubr.f32.gmra.mrb[0].mxu0 %v602
      %v683 = vpop.f32.mrb[0].mxu0
      %v684 = vadd.f32 0.0, %v683
      %v685 = vpop.f32.mrb[0].mxu0
      %686 = vmatprep.mubr.f32.mxu0 0.0
      %687 = vmatmul.mubr.f32.gmra.mrb[0].mxu0 %v605
      %v688 = vpop.f32.mrb[0].mxu0
      %v689 = vadd.f32 0.0, %v688
      %v690 = vpop.f32.mrb[0].mxu0
      %691 = vdwg.mxu0
      %vm692 = vcmask 7168
      %v694 = vsel %vm692, %v674, 0
      %v697 = vsel %vm692, %v679, 0
      %v700 = vsel %vm692, %v684, 0
      %v703 = vsel %vm692, %v689, 0
      %vm705 = vcmask 1040384
      %v707 = vsel %vm705, %v328, 0
      %709 = vmatprep.subr.mxu0 0.0
      %710 = vmatpush1.msra.mxu0 %v707
      %711 = vmatprep.subr.mxu0 0.0
      %712 = vmatpush1.msra.mxu0 0.0
      %713 = vmatprep.subr.mxu0 0.0
      %714 = vmatpush1.msra.mxu0 0.0
      %715 = vmatprep.subr.mxu0 0.0
      %716 = vmatpush1.msra.mxu0 0.0
      %717 = vmatprep.subr.mxu0 0.0
      %718 = vmatpush1.msra.mxu0 0.0
      %719 = vmatprep.subr.mxu0 0.0
      %720 = vmatpush1.msra.mxu0 0.0
      %721 = vmatprep.subr.mxu0 0.0
      %722 = vmatpush1.msra.mxu0 0.0
      %723 = vmatprep.subr.mxu0 0.0
      %724 = vmatpush1.msra.mxu0 0.0
      %725 = vmatprep.subr.mxu0 0.0
      %726 = vmatpush1.msra.mxu0 0.0
      %727 = vmatprep.subr.mxu0 0.0
      %728 = vmatpush1.msra.mxu0 0.0
      %729 = vmatprep.subr.mxu0 0.0
      %730 = vmatpush1.msra.mxu0 0.0
      %731 = vmatprep.subr.mxu0 0.0
      %732 = vmatpush1.msra.mxu0 0.0
      %733 = vmatprep.subr.mxu0 0.0
      %734 = vmatpush1.msra.mxu0 0.0
      %735 = vmatprep.subr.mxu0 0.0
      %736 = vmatpush1.msra.mxu0 0.0
      %737 = vmatprep.subr.mxu0 0.0
      %738 = vmatpush1.msra.mxu0 0.0
      %739 = vmatprep.subr.mxu0 0.0
      %740 = vmatpush1.msra.mxu0 0.0
      %741 = vmatprep.subr.mxu0 0.0
      %742 = vmatpush1.msra.mxu0 0.0
      %743 = vmatprep.subr.mxu0 0.0
      %744 = vmatpush1.msra.mxu0 0.0
      %745 = vmatprep.subr.mxu0 0.0
      %746 = vmatpush1.msra.mxu0 0.0
      %747 = vmatprep.subr.mxu0 0.0
      %748 = vmatpush1.msra.mxu0 0.0
      %749 = vmatprep.subr.mxu0 0.0
      %750 = vmatpush1.msra.mxu0 0.0
      %751 = vmatprep.subr.mxu0 0.0
      %752 = vmatpush1.msra.mxu0 0.0
      %753 = vmatprep.subr.mxu0 0.0
      %754 = vmatpush1.msra.mxu0 0.0
      %755 = vmatprep.subr.mxu0 0.0
      %756 = vmatpush1.msra.mxu0 0.0
      %757 = vmatprep.subr.mxu0 0.0
      %758 = vmatpush1.msra.mxu0 0.0
      %759 = vmatprep.subr.mxu0 0.0
      %760 = vmatpush1.msra.mxu0 0.0
      %761 = vmatprep.subr.mxu0 0.0
      %762 = vmatpush1.msra.mxu0 0.0
      %763 = vmatprep.subr.mxu0 0.0
      %764 = vmatpush1.msra.mxu0 0.0
      %765 = vmatprep.subr.mxu0 0.0
      %766 = vmatpush1.msra.mxu0 0.0
      %767 = vmatprep.subr.mxu0 0.0
      %768 = vmatpush1.msra.mxu0 0.0
      %769 = vmatprep.subr.mxu0 0.0
      %770 = vmatpush1.msra.mxu0 0.0
      %771 = vmatprep.subr.mxu0 0.0
      %772 = vmatpush1.msra.mxu0 0.0
      %773 = vmatprep.mubr.f32.mxu0 0.0
      %774 = vmatmul.mubr.f32.gmra.mrb[0].mxu0 %v694
      %v775 = vpop.f32.mrb[0].mxu0
      %v776 = vadd.f32 0.0, %v775
      %v777 = vpop.f32.mrb[0].mxu0
      %778 = vmatprep.mubr.f32.mxu0 0.0
      %779 = vmatmul.mubr.f32.gmra.mrb[0].mxu0 %v697
      %v780 = vpop.f32.mrb[0].mxu0
      %v781 = vadd.f32 0.0, %v780
      %v782 = vpop.f32.mrb[0].mxu0
      %783 = vmatprep.mubr.f32.mxu0 0.0
      %784 = vmatmul.mubr.f32.gmra.mrb[0].mxu0 %v700
      %v785 = vpop.f32.mrb[0].mxu0
      %v786 = vadd.f32 0.0, %v785
      %v787 = vpop.f32.mrb[0].mxu0
      %788 = vmatprep.mubr.f32.mxu0 0.0
      %789 = vmatmul.mubr.f32.gmra.mrb[0].mxu0 %v703
      %v790 = vpop.f32.mrb[0].mxu0
      %v791 = vadd.f32 0.0, %v790
      %v792 = vpop.f32.mrb[0].mxu0
      %793 = vdwg.mxu0
      %v794 = vsub.f32 %v478, %v776
      %v795 = vsub.f32 %v483, %v781
      %v796 = vsub.f32 %v488, %v786
      %v797 = vsub.f32 %v493, %v791
      %v798 = vmul.f32 %v794, %v794
      %v799 = vmul.f32 %v795, %v795
      %v800 = vmul.f32 %v796, %v796
      %v801 = vmul.f32 %v797, %v797
      %v803 = vsel %vm496, %v798, 0
      %v806 = vsel %vm496, %v799, 0
      %v809 = vsel %vm496, %v800, 0
      %v812 = vsel %vm496, %v801, 0
      %814 = vmatprep.subr.mxu0 0.0
      %815 = vmatpush1.msra.mxu0 %v326
      %816 = vmatprep.subr.mxu0 0.0
      %817 = vmatpush1.msra.mxu0 %v327
      %818 = vmatprep.subr.mxu0 0.0
      %819 = vmatpush1.msra.mxu0 0.0
      %820 = vmatprep.subr.mxu0 0.0
      %821 = vmatpush1.msra.mxu0 0.0
      %822 = vmatprep.subr.mxu0 0.0
      %823 = vmatpush1.msra.mxu0 0.0
      %824 = vmatprep.subr.mxu0 0.0
      %825 = vmatpush1.msra.mxu0 0.0
      %826 = vmatprep.subr.mxu0 0.0
      %827 = vmatpush1.msra.mxu0 0.0
      %828 = vmatprep.subr.mxu0 0.0
      %829 = vmatpush1.msra.mxu0 0.0
      %830 = vmatprep.subr.mxu0 0.0
      %831 = vmatpush1.msra.mxu0 0.0
      %832 = vmatprep.subr.mxu0 0.0
      %833 = vmatpush1.msra.mxu0 0.0
      %834 = vmatprep.subr.mxu0 0.0
      %835 = vmatpush1.msra.mxu0 0.0
      %836 = vmatprep.subr.mxu0 0.0
      %837 = vmatpush1.msra.mxu0 0.0
      %838 = vmatprep.subr.mxu0 0.0
      %839 = vmatpush1.msra.mxu0 0.0
      %840 = vmatprep.subr.mxu0 0.0
      %841 = vmatpush1.msra.mxu0 0.0
      %842 = vmatprep.subr.mxu0 0.0
      %843 = vmatpush1.msra.mxu0 0.0
      %844 = vmatprep.subr.mxu0 0.0
      %845 = vmatpush1.msra.mxu0 0.0
      %846 = vmatprep.subr.mxu0 0.0
      %847 = vmatpush1.msra.mxu0 0.0
      %848 = vmatprep.subr.mxu0 0.0
      %849 = vmatpush1.msra.mxu0 0.0
      %850 = vmatprep.subr.mxu0 0.0
      %851 = vmatpush1.msra.mxu0 0.0
      %852 = vmatprep.subr.mxu0 0.0
      %853 = vmatpush1.msra.mxu0 0.0
      %854 = vmatprep.subr.mxu0 0.0
      %855 = vmatpush1.msra.mxu0 0.0
      %856 = vmatprep.subr.mxu0 0.0
      %857 = vmatpush1.msra.mxu0 0.0
      %858 = vmatprep.subr.mxu0 0.0
      %859 = vmatpush1.msra.mxu0 0.0
      %860 = vmatprep.subr.mxu0 0.0
      %861 = vmatpush1.msra.mxu0 0.0
      %862 = vmatprep.subr.mxu0 0.0
      %863 = vmatpush1.msra.mxu0 0.0
      %864 = vmatprep.subr.mxu0 0.0
      %865 = vmatpush1.msra.mxu0 0.0
      %866 = vmatprep.subr.mxu0 0.0
      %867 = vmatpush1.msra.mxu0 0.0
      %868 = vmatprep.subr.mxu0 0.0
      %869 = vmatpush1.msra.mxu0 0.0
      %870 = vmatprep.subr.mxu0 0.0
      %871 = vmatpush1.msra.mxu0 0.0
      %872 = vmatprep.subr.mxu0 0.0
      %873 = vmatpush1.msra.mxu0 0.0
      %874 = vmatprep.subr.mxu0 0.0
      %875 = vmatpush1.msra.mxu0 0.0
      %876 = vmatprep.subr.mxu0 0.0
      %877 = vmatpush1.msra.mxu0 0.0
      %878 = vmatprep.mubr.f32.mxu0 0.0
      %879 = vmatmul.mubr.f32.gmra.mrb[0].mxu0 %v803
      %v880 = vpop.f32.mrb[0].mxu0
      %v881 = vadd.f32 0.0, %v880
      %v882 = vpop.f32.mrb[0].mxu0
      %883 = vmatprep.mubr.f32.mxu0 0.0
      %884 = vmatmul.mubr.f32.gmra.mrb[0].mxu0 %v806
      %v885 = vpop.f32.mrb[0].mxu0
      %v886 = vadd.f32 0.0, %v885
      %v887 = vpop.f32.mrb[0].mxu0
      %888 = vmatprep.mubr.f32.mxu0 0.0
      %889 = vmatmul.mubr.f32.gmra.mrb[0].mxu0 %v809
      %v890 = vpop.f32.mrb[0].mxu0
      %v891 = vadd.f32 0.0, %v890
      %v892 = vpop.f32.mrb[0].mxu0
      %893 = vmatprep.mubr.f32.mxu0 0.0
      %894 = vmatmul.mubr.f32.gmra.mrb[0].mxu0 %v812
      %v895 = vpop.f32.mrb[0].mxu0
      %v896 = vadd.f32 0.0, %v895
      %v897 = vpop.f32.mrb[0].mxu0
      %898 = vdwg.mxu0
      %899 = vmatprep.subr.mxu0 0.0
      %900 = vmatpush1.msra.mxu0 %v881
      %901 = vmatprep.subr.mxu0 0.0
      %902 = vmatpush1.msra.mxu0 %v886
      %903 = vmatprep.subr.mxu0 0.0
      %904 = vmatpush1.msra.mxu0 %v891
      %905 = vmatprep.subr.mxu0 0.0
      %906 = vmatpush1.msra.mxu0 %v896
      %907 = vmatprep.subr.mxu0 0.0
      %908 = vmatpush1.msra.mxu0 0.0
      %909 = vmatprep.subr.mxu0 0.0
      %910 = vmatpush1.msra.mxu0 0.0
      %911 = vmatprep.subr.mxu0 0.0
      %912 = vmatpush1.msra.mxu0 0.0
      %913 = vmatprep.subr.mxu0 0.0
      %914 = vmatpush1.msra.mxu0 0.0
      %915 = vmatprep.subr.mxu0 0.0
      %916 = vmatpush1.msra.mxu0 0.0
      %917 = vmatprep.subr.mxu0 0.0
      %918 = vmatpush1.msra.mxu0 0.0
      %919 = vmatprep.subr.mxu0 0.0
      %920 = vmatpush1.msra.mxu0 0.0
      %921 = vmatprep.subr.mxu0 0.0
      %922 = vmatpush1.msra.mxu0 0.0
      %923 = vmatprep.subr.mxu0 0.0
      %924 = vmatpush1.msra.mxu0 0.0
      %925 = vmatprep.subr.mxu0 0.0
      %926 = vmatpush1.msra.mxu0 0.0
      %927 = vmatprep.subr.mxu0 0.0
      %928 = vmatpush1.msra.mxu0 0.0
      %929 = vmatprep.subr.mxu0 0.0
      %930 = vmatpush1.msra.mxu0 0.0
      %931 = vmatprep.subr.mxu0 0.0
      %932 = vmatpush1.msra.mxu0 0.0
      %933 = vmatprep.subr.mxu0 0.0
      %934 = vmatpush1.msra.mxu0 0.0
      %935 = vmatprep.subr.mxu0 0.0
      %936 = vmatpush1.msra.mxu0 0.0
      %937 = vmatprep.subr.mxu0 0.0
      %938 = vmatpush1.msra.mxu0 0.0
      %939 = vmatprep.subr.mxu0 0.0
      %940 = vmatpush1.msra.mxu0 0.0
      %941 = vmatprep.subr.mxu0 0.0
      %942 = vmatpush1.msra.mxu0 0.0
      %943 = vmatprep.subr.mxu0 0.0
      %944 = vmatpush1.msra.mxu0 0.0
      %945 = vmatprep.subr.mxu0 0.0
      %946 = vmatpush1.msra.mxu0 0.0
      %947 = vmatprep.subr.mxu0 0.0
      %948 = vmatpush1.msra.mxu0 0.0
      %949 = vmatprep.subr.mxu0 0.0
      %950 = vmatpush1.msra.mxu0 0.0
      %951 = vmatprep.subr.mxu0 0.0
      %952 = vmatpush1.msra.mxu0 0.0
      %953 = vmatprep.subr.mxu0 0.0
      %954 = vmatpush1.msra.mxu0 0.0
      %955 = vmatprep.subr.mxu0 0.0
      %956 = vmatpush1.msra.mxu0 0.0
      %957 = vmatprep.subr.mxu0 0.0
      %958 = vmatpush1.msra.mxu0 0.0
      %959 = vmatprep.subr.mxu0 0.0
      %960 = vmatpush1.msra.mxu0 0.0
      %961 = vmatprep.subr.mxu0 0.0
      %962 = vmatpush1.msra.mxu0 0.0
      %963 = vmatprep.mubr.f32.mxu0 0.0
      %964 = vmatmul.mubr.f32.gmra.mrb[0].mxu0 %v596
      %v965 = vpop.f32.mrb[0].mxu0
      %v966 = vadd.f32 1e-05, %v965
      %v967 = vpop.f32.mrb[0].mxu0
      %968 = vmatprep.mubr.f32.mxu0 0.0
      %969 = vmatmul.mubr.f32.gmra.mrb[0].mxu0 %v599
      %v970 = vpop.f32.mrb[0].mxu0
      %v971 = vadd.f32 1e-05, %v970
      %v972 = vpop.f32.mrb[0].mxu0
      %973 = vmatprep.mubr.f32.mxu0 0.0
      %974 = vmatmul.mubr.f32.gmra.mrb[0].mxu0 %v602
      %v975 = vpop.f32.mrb[0].mxu0
      %v976 = vadd.f32 1e-05, %v975
      %v977 = vpop.f32.mrb[0].mxu0
      %978 = vmatprep.mubr.f32.mxu0 0.0
      %979 = vmatmul.mubr.f32.gmra.mrb[0].mxu0 %v605
      %v980 = vpop.f32.mrb[0].mxu0
      %v981 = vadd.f32 1e-05, %v980
      %v982 = vpop.f32.mrb[0].mxu0
      %983 = vdwg.mxu0
      %v984 = vrsqrt.pop %v966
      %v985 = vrsqrt.pop %v971
      %v986 = vrsqrt.pop %v976
      %v987 = vrsqrt.pop %v981
      %v988 = vmul.f32 %v984, %v314
      %v989 = vmul.f32 %v985, %v315
      %v990 = vmul.f32 %v986, %v316
      %v991 = vmul.f32 %v987, %v317
      %v993 = vsel %vm692, %v988, 0
      %v996 = vsel %vm692, %v989, 0
      %v999 = vsel %vm692, %v990, 0
      %v1002 = vsel %vm692, %v991, 0
      %1004 = vmatprep.subr.mxu0 0.0
      %1005 = vmatpush1.msra.mxu0 %v707
      %1006 = vmatprep.subr.mxu0 0.0
      %1007 = vmatpush1.msra.mxu0 0.0
      %1008 = vmatprep.subr.mxu0 0.0
      %1009 = vmatpush1.msra.mxu0 0.0
      %1010 = vmatprep.subr.mxu0 0.0
      %1011 = vmatpush1.msra.mxu0 0.0
      %1012 = vmatprep.subr.mxu0 0.0
      %1013 = vmatpush1.msra.mxu0 0.0
      %1014 = vmatprep.subr.mxu0 0.0
      %1015 = vmatpush1.msra.mxu0 0.0
      %1016 = vmatprep.subr.mxu0 0.0
      %1017 = vmatpush1.msra.mxu0 0.0
      %1018 = vmatprep.subr.mxu0 0.0
      %1019 = vmatpush1.msra.mxu0 0.0
      %1020 = vmatprep.subr.mxu0 0.0
      %1021 = vmatpush1.msra.mxu0 0.0
      %1022 = vmatprep.subr.mxu0 0.0
      %1023 = vmatpush1.msra.mxu0 0.0
      %1024 = vmatprep.subr.mxu0 0.0
      %1025 = vmatpush1.msra.mxu0 0.0
      %1026 = vmatprep.subr.mxu0 0.0
      %1027 = vmatpush1.msra.mxu0 0.0
      %1028 = vmatprep.subr.mxu0 0.0
      %1029 = vmatpush1.msra.mxu0 0.0
      %1030 = vmatprep.subr.mxu0 0.0
      %1031 = vmatpush1.msra.mxu0 0.0
      %1032 = vmatprep.subr.mxu0 0.0
      %1033 = vmatpush1.msra.mxu0 0.0
      %1034 = vmatprep.subr.mxu0 0.0
      %1035 = vmatpush1.msra.mxu0 0.0
      %1036 = vmatprep.subr.mxu0 0.0
      %1037 = vmatpush1.msra.mxu0 0.0
      %1038 = vmatprep.subr.mxu0 0.0
      %1039 = vmatpush1.msra.mxu0 0.0
      %1040 = vmatprep.subr.mxu0 0.0
      %1041 = vmatpush1.msra.mxu0 0.0
      %1042 = vmatprep.subr.mxu0 0.0
      %1043 = vmatpush1.msra.mxu0 0.0
      %1044 = vmatprep.subr.mxu0 0.0
      %1045 = vmatpush1.msra.mxu0 0.0
      %1046 = vmatprep.subr.mxu0 0.0
      %1047 = vmatpush1.msra.mxu0 0.0
      %1048 = vmatprep.subr.mxu0 0.0
      %1049 = vmatpush1.msra.mxu0 0.0
      %1050 = vmatprep.subr.mxu0 0.0
      %1051 = vmatpush1.msra.mxu0 0.0
      %1052 = vmatprep.subr.mxu0 0.0
      %1053 = vmatpush1.msra.mxu0 0.0
      %1054 = vmatprep.subr.mxu0 0.0
      %1055 = vmatpush1.msra.mxu0 0.0
      %1056 = vmatprep.subr.mxu0 0.0
      %1057 = vmatpush1.msra.mxu0 0.0
      %1058 = vmatprep.subr.mxu0 0.0
      %1059 = vmatpush1.msra.mxu0 0.0
      %1060 = vmatprep.subr.mxu0 0.0
      %1061 = vmatpush1.msra.mxu0 0.0
      %1062 = vmatprep.subr.mxu0 0.0
      %1063 = vmatpush1.msra.mxu0 0.0
      %1064 = vmatprep.subr.mxu0 0.0
      %1065 = vmatpush1.msra.mxu0 0.0
      %1066 = vmatprep.subr.mxu0 0.0
      %1067 = vmatpush1.msra.mxu0 0.0
      %1068 = vmatprep.mubr.f32.mxu0 0.0
      %1069 = vmatmul.mubr.f32.gmra.mrb[0].mxu0 %v993
      %v1070 = vpop.f32.mrb[0].mxu0
      %v1071 = vadd.f32 0.0, %v1070
      %v1072 = vpop.f32.mrb[0].mxu0
      %1073 = vmatprep.mubr.f32.mxu0 0.0
      %1074 = vmatmul.mubr.f32.gmra.mrb[0].mxu0 %v996
      %v1075 = vpop.f32.mrb[0].mxu0
      %v1076 = vadd.f32 0.0, %v1075
      %v1077 = vpop.f32.mrb[0].mxu0
      %1078 = vmatprep.mubr.f32.mxu0 0.0
      %1079 = vmatmul.mubr.f32.gmra.mrb[0].mxu0 %v999
      %v1080 = vpop.f32.mrb[0].mxu0
      %v1081 = vadd.f32 0.0, %v1080
      %v1082 = vpop.f32.mrb[0].mxu0
      %1083 = vmatprep.mubr.f32.mxu0 0.0
      %1084 = vmatmul.mubr.f32.gmra.mrb[0].mxu0 %v1002
      %v1085 = vpop.f32.mrb[0].mxu0
      %v1086 = vadd.f32 0.0, %v1085
      %v1087 = vpop.f32.mrb[0].mxu0
      %1088 = vdwg.mxu0
      %v1089 = vmul.f32 %v794, %v1071
      %v1090 = vmul.f32 %v795, %v1076
      %v1091 = vmul.f32 %v796, %v1081
      %v1092 = vmul.f32 %v797, %v1086
      %1094 = vset.pattern.permute.xlu0 0
      %1095 = vperm.xlu0 %1094, %v318
      %v1096 = vpop.permute.xlu0 %1095
      %1099 = vset.pattern.permute.xlu0 0
      %1100 = vperm.xlu0 %1099, %v319
      %v1101 = vpop.permute.xlu0 %1100
      %1104 = vset.pattern.permute.xlu0 0
      %1105 = vperm.xlu0 %1104, %v320
      %v1106 = vpop.permute.xlu0 %1105
      %1109 = vset.pattern.permute.xlu0 0
      %1110 = vperm.xlu0 %1109, %v321
      %v1111 = vpop.permute.xlu0 %1110
      %v1113 = vadd.f32 %v1089, %v1096
      %v1114 = vadd.f32 %v1090, %v1101
      %v1115 = vadd.f32 %v1091, %v1106
      %v1116 = vadd.f32 %v1092, %v1111
      %v1117 = vand.u32 2147483647, %v1113
      %v1118 = vand.u32 2147483647, %v1114
      %v1119 = vand.u32 2147483647, %v1115
      %v1120 = vand.u32 2147483647, %v1116
      %v1121 = vsub.f32 0.0, %v1117
      %v1122 = vsub.f32 0.0, %v1118
      %v1123 = vsub.f32 0.0, %v1119
      %v1124 = vsub.f32 0.0, %v1120
      %v1125 = vmul.f32 %v1121, 1.442695
      %v1126 = vpow.pop %v1125
      %v1127 = vmul.f32 %v1122, 1.442695
      %v1128 = vpow.pop %v1127
      %v1129 = vmul.f32 %v1123, 1.442695
      %v1130 = vpow.pop %v1129
      %v1131 = vmul.f32 %v1124, 1.442695
      %v1132 = vpow.pop %v1131
      %vm1133 = vcmp.ge.f32.partialorder %v1113, 0.0
      %vm1134 = vcmp.ge.f32.partialorder %v1114, 0.0
      %vm1135 = vcmp.ge.f32.partialorder %v1115, 0.0
      %vm1136 = vcmp.ge.f32.partialorder %v1116, 0.0
      %v1137 = vadd.f32 %v1126, %v1126
      %v1138 = vadd.f32 %v1128, %v1128
      %v1139 = vadd.f32 %v1130, %v1130
      %v1140 = vadd.f32 %v1132, %v1132
      %v1141 = vmul.f32 %v1126, %v1126
      %v1142 = vmul.f32 %v1128, %v1128
      %v1143 = vmul.f32 %v1130, %v1130
      %v1144 = vmul.f32 %v1132, %v1132
      %v1145 = vadd.f32 %v1137, 1.0
      %v1146 = vadd.f32 %v1138, 1.0
      %v1147 = vadd.f32 %v1139, 1.0
      %v1148 = vadd.f32 %v1140, 1.0
      %v1149 = vadd.f32 %v1141, %v1137
      %v1150 = vadd.f32 %v1142, %v1138
      %v1151 = vadd.f32 %v1143, %v1139
      %v1152 = vadd.f32 %v1144, %v1140
      %v1153 = vsel %vm1133, %v1145, %v1149
      %v1154 = vsel %vm1134, %v1146, %v1150
      %v1155 = vsel %vm1135, %v1147, %v1151
      %v1156 = vsel %vm1136, %v1148, %v1152
      %v1157 = vadd.f32 %v1141, %v1141
      %v1158 = vadd.f32 %v1142, %v1142
      %v1159 = vadd.f32 %v1143, %v1143
      %v1160 = vadd.f32 %v1144, %v1144
      %v1161 = vsel %vm1133, %v1157, 2.0
      %v1162 = vsel %vm1134, %v1158, 2.0
      %v1163 = vsel %vm1135, %v1159, 2.0
      %v1164 = vsel %vm1136, %v1160, 2.0
      %v1165 = vadd.f32 %v1153, %v1161
      %v1166 = vadd.f32 %v1154, %v1162
      %v1167 = vadd.f32 %v1155, %v1163
      %v1168 = vadd.f32 %v1156, %v1164
      %v1169 = vmul.f32 %v1113, %v1153
      %v1170 = vmul.f32 %v1114, %v1154
      %v1171 = vmul.f32 %v1115, %v1155
      %v1172 = vmul.f32 %v1116, %v1156
      %v1173 = vrcp.pop %v1165
      %v1174 = vrcp.pop %v1166
      %v1175 = vrcp.pop %v1167
      %v1176 = vrcp.pop %v1168
      %v1177 = vmul.f32 %v1169, %v1173
      %v1178 = vmul.f32 %v1170, %v1174
      %v1179 = vmul.f32 %v1171, %v1175
      %v1180 = vmul.f32 %v1172, %v1176
      %1181 = vst.msk [vmem:[%s305] sm:$0xff] %vm496, %v1177
      %1182 = vst.msk [vmem:[%s305 + $0x8] sm:$0xff] %vm496, %v1178
      %1183 = vst.msk [vmem:[%s305 + $0x10] sm:$0xff] %vm496, %v1179
      %1184 = vst.msk [vmem:[%s305 + $0x18] sm:$0xff] %vm496, %v1180
      %p1185 = scmp.lt.s32.totalorder %s19, 1
      %s1186 = scalar_select %p1185, %s19, 1
      %s1187 = smul.addr %s1186, 4
      %s1188 = smul.addr %s1187, 8
      %s1189 = scalar_lea.vmem %s8, %s1188
      // Predicated region
      $region53: #{tpu_custom_call.1} parent=51 // pred_check
        %p1190 = pneg %p210
      $region54: #{tpu_custom_call.1} parent=51 // pred_check_branch
        %1192 = sbr.rel (%p1190) target = $region56
      $region55: #{tpu_custom_call.1} parent=51 // pred_region
        _
      $region56: #{tpu_custom_call.1} parent=51 // pred_fallthru
        _
    $region52: #{tpu_custom_call.1} parent=5 // pred_fallthru
      _
    %p1193 = scmp.le.s32.totalorder 2, %s14
    // Predicated region
    $region57: #{tpu_custom_call.1} parent=5 // pred_check
      %p1194 = pneg %p1193
    $region58: #{tpu_custom_call.1} parent=5 // pred_check_branch
      %1196 = sbr.rel (%p1194) target = $region60
    $region59: #{tpu_custom_call.1} parent=5 // pred_region
      %s1197 = ssub.s32 %s14, 2
      // Predicated region
      $region61: #{tpu_custom_call.1} parent=59 // pred_check
        %p1198 = pneg %p216
      $region62: #{tpu_custom_call.1} parent=59 // pred_check_branch
        %1200 = sbr.rel (%p1198) target = $region64
      $region63: #{tpu_custom_call.1} parent=59 // pred_region
        %p1201 = scmp.lt.s32.totalorder %s20, 1
        %s1202 = scalar_select %p1201, %s20, 1
        %s1203 = smul.addr %s1202, 4
        %s1204 = smul.addr %s1203, 8
        %s1205 = scalar_lea.vmem %s8, %s1204
      $region64: #{tpu_custom_call.1} parent=59 // pred_fallthru
        _
    $region60: #{tpu_custom_call.1} parent=5 // pred_fallthru
      _
  $region6: #{tpu_custom_call.1} parent=0 // loop_footer
    %s18 = sadd.s32 1, %s14
  $region7: #{tpu_custom_call.1} parent=0 // loop_footer_branch
    %13 = sbr.rel target = $region3
  $region8: #{tpu_custom_call.1} parent=0 // loop_exit
    _

</llo_original>
